<compile_context>
chip_gen: v6e
topology: v6e:2x2x1
jax: 0.10.0
libtpu: 0.0.40
codegen_flags: <defaults>
</compile_context>

<pallas_src>
import jax
import jax.numpy as jnp
from jax.experimental import pallas as pl
from jax.experimental.pallas import tpu as pltpu


def _concat_kernel(x_ref, w_ref, b_ref, o_ref):
    # x_ref: (C_in, t_hw)   bf16  one batch's spatial tile (channels on sublanes)
    # w_ref: (t_co, C_in)   bf16  fused 1x1-conv weight rows for this channel block
    # b_ref: (t_co, 1)      f32   fused bias rows
    # o_ref: (t_co, t_hw)   f32   output tile, already in cat(dim=1) row order
    y = jnp.dot(w_ref[...], x_ref[...], preferred_element_type=jnp.float32)
    o_ref[...] = (y + b_ref[...]).astype(o_ref.dtype)


def _round_down(x, m):
    return (x // m) * m


def concat_forward(x_nchw, weights, biases):
    """Pallas equivalent of Concat([conv1x1, ...]) forward.

    Args:
      x_nchw:  (B, C_in, H, W) float32
      weights: (N_nets, C_in, C_out) float32   (1x1 conv weights, per net)
      biases:  (N_nets, C_out) float32

    Returns:
      (B, N_nets * C_out, H, W) float32  -- torch.cat([net(x)...], dim=1)
    """
    B, C_in, H, W = x_nchw.shape
    N, C_in_w, C_out = weights.shape
    assert C_in_w == C_in
    HW = H * W
    C_total = N * C_out

    # --- Fuse the N nets: row n*C_out + o of w_fused is net n's channel o ---
    w_fused = jnp.transpose(weights, (0, 2, 1)).reshape(C_total, C_in)
    b_fused = biases.reshape(C_total, 1).astype(jnp.float32)

    # bf16 inputs for the MXU; accumulation / bias / output stay f32.
    w_bf16 = w_fused.astype(jnp.bfloat16)
    x_rows = x_nchw.reshape(B, C_in, HW).astype(jnp.bfloat16)  # pure reshape + cast

    bytes_x, bytes_w, bytes_b, bytes_o = 2, 2, 4, 4

    # --- Hardware-aware VMEM budget ---
    try:
        vmem_cap = int(pltpu.get_tpu_info().vmem_capacity_bytes)
    except Exception:
        vmem_cap = 64 * 1024 * 1024  # conservative (v7x-sized) fallback
    budget = int(vmem_cap * 0.70)

    # --- Output-channel tile (innermost grid axis) ---
    # Keeps VMEM independent of the number of fused sub-nets; 256 rows keeps
    # the MXU M dimension a 256-multiple on v6e/v7x.  Must be a multiple of 8.
    t_co = C_total if C_total <= 512 else 256

    # --- Spatial (lane) tile from the VMEM budget ---
    # Double-buffered x + out per lane column, plus (double-buffered) weights/bias.
    per_col = 2 * (bytes_x * C_in + bytes_o * t_co)
    fixed = 2 * (bytes_w * t_co * C_in + bytes_b * t_co)
    t_hw_cap = max(128, (budget - fixed) // max(per_col, 1))
    t_hw_cap = min(t_hw_cap, 8192)
    if HW <= t_hw_cap:
        t_hw = HW
    else:
        # Largest multiple of 128 <= cap that evenly divides HW (balanced,
        # unmasked stores); otherwise fall back to the largest 128-multiple.
        cap128 = max(128, _round_down(t_hw_cap, 128))
        t_hw = 0
        for cand in range(cap128, 0, -128):
            if HW % cand == 0:
                t_hw = cand
                break
        if t_hw == 0:
            t_hw = cap128

    n_hw = pl.cdiv(HW, t_hw)
    n_co = pl.cdiv(C_total, t_co)

    # --- Guarantee >=2 grid points so v7x's two TensorCores both get work ---
    if B * n_hw * n_co < 2 and HW >= 256:
        t_hw = max(128, _round_down(HW // 2, 128))
        n_hw = pl.cdiv(HW, t_hw)

    grid = (B, n_hw, n_co)

    # --- VMEM limit derived from the actual tiles (headroom, under phys cap) ---
    tile_bytes = (2 * bytes_x * C_in * t_hw      # x, double-buffered
                  + 2 * bytes_o * t_co * t_hw    # out, double-buffered
                  + 2 * bytes_w * t_co * C_in    # weights
                  + 2 * bytes_b * t_co)          # bias
    vmem_limit = int(tile_bytes * 1.5) + (4 << 20)
    vmem_limit = max(vmem_limit, 16 << 20)
    vmem_limit = min(vmem_limit, int(vmem_cap * 0.85))

    cost = pl.CostEstimate(
        flops=2 * B * HW * C_in * C_total,
        transcendentals=0,
        bytes_accessed=(bytes_x * B * HW * C_in + bytes_o * B * HW * C_total
                        + bytes_w * C_total * C_in + bytes_b * C_total),
    )

    out = pl.pallas_call(
        _concat_kernel,
        out_shape=jax.ShapeDtypeStruct((B, C_total, HW), jnp.float32),
        grid_spec=pltpu.PrefetchScalarGridSpec(
            num_scalar_prefetch=0,
            grid=grid,
            in_specs=[
                # x: independent of the channel-block axis -> stays resident
                # across the (innermost) c loop.
                pl.BlockSpec((pl.Squeezed(), C_in, t_hw),
                             lambda b, j, c: (b, 0, j)),
                pl.BlockSpec((t_co, C_in), lambda b, j, c: (c, 0)),
                pl.BlockSpec((t_co, 1), lambda b, j, c: (c, 0)),
            ],
            out_specs=pl.BlockSpec((pl.Squeezed(), t_co, t_hw),
                                   lambda b, j, c: (b, c, j)),
        ),
        compiler_params=pltpu.CompilerParams(
            dimension_semantics=("parallel", "parallel", "parallel"),
            vmem_limit_bytes=vmem_limit,
        ),
        cost_estimate=cost,
    )(x_rows, w_bf16, b_fused)

    # (B, N*C_out, H*W) -> (B, N*C_out, H, W): pure reshape, already in
    # torch.cat(dim=1) channel order.
    return out.reshape(B, C_total, H, W)


if __name__ == "__main__":
    # Small, deterministic shapes.
    B, C_in, H, W = 2, 4, 16, 16
    N_NETS, C_OUT = 3, 8

    key = jax.random.PRNGKey(0)
    kx, kw, kb = jax.random.split(key, 3)
    x = jax.random.normal(kx, (B, C_in, H, W), dtype=jnp.float32)
    weights = jax.random.normal(kw, (N_NETS, C_in, C_OUT), dtype=jnp.float32) * 0.1
    biases = jax.random.normal(kb, (N_NETS, C_OUT), dtype=jnp.float32) * 0.1

    out = concat_forward(x, weights, biases)
    out = jax.block_until_ready(out)
    assert out.shape == (B, N_NETS * C_OUT, H, W), out.shape

    # Reference 1: same bf16-rounded inputs, f32 accumulation (tight check of
    # the kernel's math path).
    xb = x.astype(jnp.bfloat16).astype(jnp.float32)
    wb = weights.astype(jnp.bfloat16).astype(jnp.float32)
    ref_bf = jnp.concatenate(
        [jnp.einsum("bchw,co->bohw", xb, wb[n],
                    precision=jax.lax.Precision.HIGHEST)
         + biases[n][None, :, None, None] for n in range(N_NETS)],
        axis=1)
    assert jnp.allclose(out, ref_bf, atol=1e-4, rtol=1e-4)

    # Reference 2: pure f32 torch-equivalent semantics (loose tolerance for
    # the bf16 input cast).
    ref_f32 = jnp.concatenate(
        [jnp.einsum("bchw,co->bohw", x, weights[n],
                    precision=jax.lax.Precision.HIGHEST)
         + biases[n][None, :, None, None] for n in range(N_NETS)],
        axis=1)
    assert jnp.allclose(out, ref_f32, atol=5e-2, rtol=5e-2)

    print("KERNEL_OK")
</pallas_src>

<mosaic_0001>
module attributes {stable_mosaic.version = 11 : i64} {
  func.func @_concat_kernel(%arg0: i32, %arg1: i32, %arg2: i32, %arg3: memref<1x4x256xbf16, #tpu.memory_space<vmem>>, %arg4: memref<24x4xbf16, #tpu.memory_space<vmem>>, %arg5: memref<24x1xf32, #tpu.memory_space<vmem>>, %arg6: memref<1x24x256xf32, #tpu.memory_space<vmem>>) attributes {dimension_semantics = [#tpu.dimension_semantics<parallel>, #tpu.dimension_semantics<parallel>, #tpu.dimension_semantics<parallel>], iteration_bounds = array<i64: 2, 1, 1>, scalar_prefetch = 0 : i64, scratch_operands = 0 : i64, tpu.core_type = #tpu.core_type<tc>, window_params = [{transform_indices = @transform_0, window_bounds = array<i64: 1, 4, 256>}, {transform_indices = @transform_1, window_bounds = array<i64: 24, 4>}, {transform_indices = @transform_2, window_bounds = array<i64: 24, 1>}, {transform_indices = @transform_3, window_bounds = array<i64: 1, 24, 256>}]} {
    %c0 = arith.constant 0 : index
    %c0_0 = arith.constant 0 : index
    %0 = vector.load %arg4[%c0, %c0_0] : memref<24x4xbf16, #tpu.memory_space<vmem>>, vector<24x4xbf16>
    %c0_1 = arith.constant 0 : index
    %c0_2 = arith.constant 0 : index
    %c0_3 = arith.constant 0 : index
    %1 = vector.load %arg3[%c0_1, %c0_2, %c0_3] : memref<1x4x256xbf16, #tpu.memory_space<vmem>>, vector<1x4x256xbf16>
    %2 = vector.shape_cast %1 : vector<1x4x256xbf16> to vector<4x256xbf16>
    %cst = arith.constant dense<0.000000e+00> : vector<24x256xf32>
    %3 = tpu.matmul %0, %2, %cst {dimension_numbers = #tpu.dot_dimension_numbers<[1], [0], [0], [1], [0, 0, 1, 1], [], []>} : vector<24x4xbf16>, vector<4x256xbf16>, vector<24x256xf32> -> vector<24x256xf32>
    %c0_4 = arith.constant 0 : index
    %c0_5 = arith.constant 0 : index
    %4 = vector.load %arg5[%c0_4, %c0_5] : memref<24x1xf32, #tpu.memory_space<vmem>>, vector<24x1xf32>
    %5 = vector.broadcast %4 : vector<24x1xf32> to vector<24x256xf32>
    %6 = arith.addf %3, %5 : vector<24x256xf32>
    %c0_6 = arith.constant 0 : index
    %c0_7 = arith.constant 0 : index
    %c0_8 = arith.constant 0 : index
    %7 = vector.load %arg6[%c0_6, %c0_7, %c0_8] : memref<1x24x256xf32, #tpu.memory_space<vmem>>, vector<1x24x256xf32>
    %8 = vector.shape_cast %7 : vector<1x24x256xf32> to vector<24x256xf32>
    %9 = vector.shape_cast %6 : vector<24x256xf32> to vector<1x24x256xf32>
    tpu.vector_store %arg6[%c0_6, %c0_7, %c0_8], %9 {strides = array<i32>} : memref<1x24x256xf32, #tpu.memory_space<vmem>>, vector<1x24x256xf32>,
    return
  }
  func.func @transform_0(%arg0: i32, %arg1: i32, %arg2: i32) -> (i32, i32, i32) {
    %c0_i32 = arith.constant 0 : i32
    %c0_i32_0 = arith.constant 0 : i32
    return %arg0, %c0_i32, %arg1 : i32, i32, i32
  }
  func.func @transform_1(%arg0: i32, %arg1: i32, %arg2: i32) -> (i32, i32) {
    %c0_i32 = arith.constant 0 : i32
    %c0_i32_0 = arith.constant 0 : i32
    return %arg2, %c0_i32 : i32, i32
  }
  func.func @transform_2(%arg0: i32, %arg1: i32, %arg2: i32) -> (i32, i32) {
    %c0_i32 = arith.constant 0 : i32
    %c0_i32_0 = arith.constant 0 : i32
    return %arg2, %c0_i32 : i32, i32
  }
  func.func @transform_3(%arg0: i32, %arg1: i32, %arg2: i32) -> (i32, i32, i32) {
    %c0_i32 = arith.constant 0 : i32
    return %arg0, %arg2, %arg1 : i32, i32, i32
  }
}

</mosaic_0001>

<llo_original>
// kernel: tpu_custom_call.1
$region0: #{tpu_custom_call.1}
  #allocation0 [shape = 'u32[]', space=smem, size = 0x4, offset = 0x4, fixed_abs, tag = 'smem constant byte address 0x4 - core index']
  #allocation1 [shape = 'u32[144,128]{1,0:T(1,128)}', space=vmem, size = 0x12000, scoped, tag = 'internal scratch']
  %s0 = inlined_call_operand.vmem [shape: bf16[2,4,256], index: 0, kind: input, shape index: {}]
  %s1 = inlined_call_operand.vmem [shape: bf16[24,4], index: 1, kind: input, shape index: {}]
  %s2 = inlined_call_operand.vmem [shape: f32[24,1], index: 2, kind: input, shape index: {}]
  %s3 = inlined_call_operand.hbm [shape: f32[2,24,256], index: 3, kind: output, shape index: {}]
  %s4 = sld [smem:[#allocation0]]
  $region45: #{tpu_custom_call.1} parent=0
    _
  %s6 = ssub.s32 1, %s4
  %s7 = scalar_select 0, %s6, %s4
  $region1: #{tpu_custom_call.1} parent=0
    #allocation2 [shape = 'u8[49152]{0}', space=vmem, size = 0xc000, scoped, tag = 'output window, operand 0']
    #allocation3 [shape = 's32[2]{0}', space=sflag, size = 0x8, scoped, tag = 'scoped memory for tpu_custom_call.1']
    %8 = vsyncpa [#allocation3], 0
    %s9 = scalar_lea.sflag [#allocation3], 1
    %10 = vsyncpa %s9, 0
    loop: start=0, step=1, limit=4
    $region2: #{tpu_custom_call.1} parent=1 // loop_pre_header
      _
    $region3: #{tpu_custom_call.1} parent=1 // loop_header
      %s12 = sphi 0, %s16
      %p13 = scmp.ge.s32.totalorder %s12, 4
      %s19 = sphi 0, %s38
      %s20 = sphi 0, %s34
      %s21 = sphi 0, %s30
      %s22 = sphi 0, %s19
      %s23 = sphi 0, %s20
      %s24 = sphi 0, %s21
      %s25 = sphi 0, %s22
      %s26 = sphi 0, %s23
      %s27 = sphi 0, %s24
      %s43 = sphi 0, %s45
      %s46 = sphi 0, %s43
      %s47 = sphi 0, %s46
      %s63 = sphi 0, %s47
      %s69 = sphi 0, %s71
      %s72 = sphi 0, %s69
      %s73 = sphi 0, %s72
      %s89 = sphi 0, %s73
      %s95 = sphi 0, %s97
      %s98 = sphi 0, %s95
      %s99 = sphi 0, %s98
      %s115 = sphi 0, %s99
      %s125 = sphi 0, %s127
      %s128 = sphi 0, %s125
      %s129 = sphi 0, %s128
      %s145 = sphi 0, %s129
    $region4: #{tpu_custom_call.1} parent=1 // loop_header_branch
      %15 = sbr.rel (%p13) target = $region8
    $region5: #{tpu_custom_call.1} parent=1 // loop_body
      %s17 = ssub.s32 %s12, 1
      %s18 = ssub.s32 %s12, 2
      %s28 = sadd.s32 1, %s21
      %p29 = scmp.ge.s32.totalorder %s28, 1
      %s30 = scalar_select %p29, 0, %s28
      %s31 = sadd.s32 1, %s20
      %s32 = scalar_select %p29, %s31, %s20
      %p33 = scmp.ge.s32.totalorder %s32, 1
      %s34 = scalar_select %p33, 0, %s32
      %s35 = sadd.s32 1, %s19
      %s36 = scalar_select %p33, %s35, %s19
      %p37 = scmp.ge.s32.totalorder %s36, 2
      %s38 = scalar_select %p37, 0, %s36
      %s39 = ssub.s32 %s19, %s38
      %s40 = ssub.s32 %s20, %s34
      %s41 = sor.u32 %s39, %s40
      %p42 = scmp.eq.s32.totalorder %s41, 0
      %s44 = sadd.s32 %s43, 1
      %s45 = scalar_select %p42, %s43, %s44
      %p48 = pneg %p42
      %p49 = scmp.eq.s32.totalorder %s12, 1
      %p50 = por %p48, %p49
      %p51 = scmp.ne.s32.totalorder %s43, %s46
      %p52 = scmp.eq.s32.totalorder %s12, 0
      %p53 = por %p51, %p52
      %p54 = scmp.ne.s32.totalorder %s43, %s46
      %p55 = scmp.eq.s32.totalorder %s17, 1
      %p56 = por %p54, %p55
      %p57 = scmp.ne.s32.totalorder %s46, %s47
      %p58 = scmp.eq.s32.totalorder %s17, 0
      %p59 = por %p57, %p58
      %p60 = scmp.ne.s32.totalorder %s46, %s47
      %p61 = scmp.eq.s32.totalorder %s18, 1
      %p62 = por %p60, %p61
      %p64 = scmp.ne.s32.totalorder %s47, %s63
      %p65 = scmp.eq.s32.totalorder %s18, 0
      %p66 = por %p64, %p65
      %s67 = ssub.s32 %s21, %s30
      %p68 = scmp.eq.s32.totalorder %s67, 0
      %s70 = sadd.s32 %s69, 1
      %s71 = scalar_select %p68, %s69, %s70
      %p74 = pneg %p68
      %p75 = scmp.eq.s32.totalorder %s12, 1
      %p76 = por %p74, %p75
      %p77 = scmp.ne.s32.totalorder %s69, %s72
      %p78 = scmp.eq.s32.totalorder %s12, 0
      %p79 = por %p77, %p78
      %p80 = scmp.ne.s32.totalorder %s69, %s72
      %p81 = scmp.eq.s32.totalorder %s17, 1
      %p82 = por %p80, %p81
      %p83 = scmp.ne.s32.totalorder %s72, %s73
      %p84 = scmp.eq.s32.totalorder %s17, 0
      %p85 = por %p83, %p84
      %p86 = scmp.ne.s32.totalorder %s72, %s73
      %p87 = scmp.eq.s32.totalorder %s18, 1
      %p88 = por %p86, %p87
      %p90 = scmp.ne.s32.totalorder %s73, %s89
      %p91 = scmp.eq.s32.totalorder %s18, 0
      %p92 = por %p90, %p91
      %s93 = ssub.s32 %s21, %s30
      %p94 = scmp.eq.s32.totalorder %s93, 0
      %s96 = sadd.s32 %s95, 1
      %s97 = scalar_select %p94, %s95, %s96
      %p100 = pneg %p94
      %p101 = scmp.eq.s32.totalorder %s12, 1
      %p102 = por %p100, %p101
      %p103 = scmp.ne.s32.totalorder %s95, %s98
      %p104 = scmp.eq.s32.totalorder %s12, 0
      %p105 = por %p103, %p104
      %p106 = scmp.ne.s32.totalorder %s95, %s98
      %p107 = scmp.eq.s32.totalorder %s17, 1
      %p108 = por %p106, %p107
      %p109 = scmp.ne.s32.totalorder %s98, %s99
      %p110 = scmp.eq.s32.totalorder %s17, 0
      %p111 = por %p109, %p110
      %p112 = scmp.ne.s32.totalorder %s98, %s99
      %p113 = scmp.eq.s32.totalorder %s18, 1
      %p114 = por %p112, %p113
      %p116 = scmp.ne.s32.totalorder %s99, %s115
      %p117 = scmp.eq.s32.totalorder %s18, 0
      %p118 = por %p116, %p117
      %s119 = ssub.s32 %s19, %s38
      %s120 = ssub.s32 %s21, %s30
      %s121 = sor.u32 %s119, %s120
      %s122 = ssub.s32 %s20, %s34
      %s123 = sor.u32 %s121, %s122
      %p124 = scmp.eq.s32.totalorder %s123, 0
      %s126 = sadd.s32 %s125, 1
      %s127 = scalar_select %p124, %s125, %s126
      %p130 = pneg %p124
      %p131 = scmp.eq.s32.totalorder %s12, 1
      %p132 = por %p130, %p131
      %p133 = scmp.ne.s32.totalorder %s125, %s128
      %p134 = scmp.eq.s32.totalorder %s12, 0
      %p135 = por %p133, %p134
      %p136 = scmp.ne.s32.totalorder %s125, %s128
      %p137 = scmp.eq.s32.totalorder %s17, 1
      %p138 = por %p136, %p137
      %p139 = scmp.ne.s32.totalorder %s128, %s129
      %p140 = scmp.eq.s32.totalorder %s17, 0
      %p141 = por %p139, %p140
      %p142 = scmp.ne.s32.totalorder %s128, %s129
      %p143 = scmp.eq.s32.totalorder %s18, 1
      %p144 = por %p142, %p143
      %p146 = scmp.ne.s32.totalorder %s129, %s145
      %p147 = scmp.eq.s32.totalorder %s18, 0
      %p148 = por %p146, %p147
      %p149 = scmp.le.s32.totalorder 1, %s12
      %p150 = scmp.lt.s32.totalorder %s12, 3
      %p151 = pnand %p149, %p150
      %p152 = pneg %p151
      // Predicated region
      $region9: #{tpu_custom_call.1} parent=5 // pred_check
        _
      $region10: #{tpu_custom_call.1} parent=5 // pred_check_branch
        %154 = sbr.rel (%p151) target = $region12
      $region11: #{tpu_custom_call.1} parent=5 // pred_region
        %s155 = ssub.s32 %s12, 1
        // Predicated region
        $region13: #{tpu_custom_call.1} parent=11 // pred_check
          %p156 = pneg %p85
        $region14: #{tpu_custom_call.1} parent=11 // pred_check_branch
          %158 = sbr.rel (%p156) target = $region16
        $region15: #{tpu_custom_call.1} parent=11 // pred_region
          %s159 = smul.u32 3, %s24
          %p160 = scmp.lt.s32.totalorder %s159, 2
          %s161 = scalar_select %p160, %s159, 2
          %s162 = smul.addr %s161, 4
          %s163 = scalar_lea.vmem %s1, %s162
          %s164 = smul.u32 3, %s24
        $region16: #{tpu_custom_call.1} parent=11 // pred_fallthru
          _
        // Predicated region
        $region17: #{tpu_custom_call.1} parent=11 // pred_check
          %p165 = pneg %p111
        $region18: #{tpu_custom_call.1} parent=11 // pred_check_branch
          %167 = sbr.rel (%p165) target = $region20
        $region19: #{tpu_custom_call.1} parent=11 // pred_region
          %s168 = smul.u32 3, %s24
          %p169 = scmp.lt.s32.totalorder %s168, 2
          %s170 = scalar_select %p169, %s168, 2
          %s171 = smul.addr %s170, 8
          %s172 = scalar_lea.vmem %s2, %s171
          %s173 = smul.u32 3, %s24
        $region20: #{tpu_custom_call.1} parent=11 // pred_fallthru
          _
      $region12: #{tpu_custom_call.1} parent=5 // pred_fallthru
        _
      %p174 = scmp.lt.s32.totalorder %s12, 2
      // Predicated region
      $region21: #{tpu_custom_call.1} parent=5 // pred_check
        %p175 = pneg %p174
      $region22: #{tpu_custom_call.1} parent=5 // pred_check_branch
        %177 = sbr.rel (%p175) target = $region24
      $region23: #{tpu_custom_call.1} parent=5 // pred_region
        // Predicated region
        $region25: #{tpu_custom_call.1} parent=23 // pred_check
          %p178 = pneg %p53
        $region26: #{tpu_custom_call.1} parent=23 // pred_check_branch
          %180 = sbr.rel (%p178) target = $region28
        $region27: #{tpu_custom_call.1} parent=23 // pred_region
          %s181 = smul.u32 2, %s20
          %p182 = scmp.lt.s32.totalorder %s19, 1
          %s183 = scalar_select %p182, %s19, 1
          %p184 = scmp.lt.s32.totalorder %s181, 1
          %s185 = scalar_select %p184, %s181, 1
          %s186 = smul.addr %s183, 2
          %s187 = sadd.s32 %s185, %s186
          %s188 = smul.addr %s187, 2
          %s189 = scalar_lea.vmem %s0, %s188
          %s190 = smul.u32 2, %s20
        $region28: #{tpu_custom_call.1} parent=23 // pred_fallthru
          _
      $region24: #{tpu_custom_call.1} parent=5 // pred_fallthru
        _
      %p191 = scmp.le.s32.totalorder 1, %s12
      %p192 = scmp.lt.s32.totalorder %s12, 3
      %p193 = pnand %p191, %p192
      %p194 = pneg %p193
      // Predicated region
      $region29: #{tpu_custom_call.1} parent=5 // pred_check
        _
      $region30: #{tpu_custom_call.1} parent=5 // pred_check_branch
        %196 = sbr.rel (%p193) target = $region32
      $region31: #{tpu_custom_call.1} parent=5 // pred_region
        %s197 = ssub.s32 %s12, 1
        %s198 = smul.u32 2, %s23
        %p199 = scmp.lt.s32.totalorder %s22, 1
        %s200 = scalar_select %p199, %s22, 1
        %p201 = scmp.lt.s32.totalorder %s198, 1
        %s202 = scalar_select %p201, %s198, 1
        %s203 = smul.addr %s200, 2
        %s204 = sadd.s32 %s202, %s203
        %s205 = smul.addr %s204, 2
        %s206 = scalar_lea.vmem %s0, %s205
        %p207 = pneg %p59
        %p208 = pneg %p56
        %s209 = smul.u32 3, %s24
        %p210 = scmp.lt.s32.totalorder %s209, 2
        %s211 = scalar_select %p210, %s209, 2
        %s212 = smul.addr %s211, 4
        %s213 = scalar_lea.vmem %s1, %s212
        %p214 = pneg %p85
        %p215 = pneg %p82
        %s216 = smul.u32 3, %s24
        %p217 = scmp.lt.s32.totalorder %s216, 2
        %s218 = scalar_select %p217, %s216, 2
        %s219 = smul.addr %s218, 8
        %s220 = scalar_lea.vmem %s2, %s219
        %p221 = pneg %p111
        %p222 = pneg %p108
        %p223 = pneg %p141
        %p224 = pneg %p138
        %s225 = sand.u32 %s128, 1
        %s226 = scalar_lea.sflag [#allocation3], %s225
        %s227 = sand.u32 %s128, 1
        %s228 = smul.addr %s227, 48
        %s229 = scalar_lea.vmem [#allocation2], %s228
        %s230 = smul.u32 2, %s23
        %p231 = scmp.lt.s32.totalorder %s22, 1
        %s232 = scalar_select %p231, %s22, 1
        %p233 = scmp.lt.s32.totalorder %s230, 1
        %s234 = scalar_select %p233, %s230, 1
        %s235 = smul.addr %s232, 2
        %s236 = sadd.s32 %s234, %s235
        %s237 = smul.addr %s236, 2
        %s238 = scalar_lea.vmem %s0, %s237
        %s239 = smul.u32 2, %s23
        %s240 = smul.u32 3, %s24
        %p241 = scmp.lt.s32.totalorder %s240, 2
        %s242 = scalar_select %p241, %s240, 2
        %s243 = smul.addr %s242, 4
        %s244 = scalar_lea.vmem %s1, %s243
        %s245 = smul.u32 3, %s24
        %s246 = smul.u32 3, %s24
        %p247 = scmp.lt.s32.totalorder %s246, 2
        %s248 = scalar_select %p247, %s246, 2
        %s249 = smul.addr %s248, 8
        %s250 = scalar_lea.vmem %s2, %s249
        %s251 = smul.u32 3, %s24
        %s252 = smul.u32 3, %s24
        %s253 = smul.u32 2, %s23
        %v255 = vld [vmem:[%s244] sm:$0xf]
        %v256 = vld [vmem:[%s244 + $0x4] sm:$0xf]
        %v257 = vld [vmem:[%s244 + $0x8] sm:$0xf]
        %v258 = vld [vmem:[%s238] sm:$0xf]
        %v259 = vld [vmem:[%s250] sm:$0xff]
        %v260 = vld [vmem:[%s250 + $0x8] sm:$0xff]
        %v261 = vld [vmem:[%s250 + $0x10] sm:$0xff]
        %263 = vset.pattern.permute.xlu0 0
        %264 = vperm.xlu0 %263, %v259
        %v265 = vpop.permute.xlu0 %264
        %268 = vset.pattern.permute.xlu0 0
        %269 = vperm.xlu0 %268, %v260
        %v270 = vpop.permute.xlu0 %269
        %273 = vset.pattern.permute.xlu0 0
        %274 = vperm.xlu0 %273, %v261
        %v275 = vpop.permute.xlu0 %274
        %v280 = vunpack.c.l.b16 %v255
        %v281 = vunpack.c.l.b16 %v256
        %v282 = vunpack.c.l.b16 %v257
        %v283 = vpack.c.b16 %v281, %v280
        %v284 = vpack.c.b16 %v282, %v282
        %v287 = vunpack.c.l.s4 1983009808
        %v288 = vunpack.c.0.s8 %v287
        %v289 = vlaneseq
        %v290 = vshrl.u32 %v289, 7
        %v291 = vsub.s32 %v288, %v290
        %v292 = vrot.slane %v258, %v291
        %v293 = vcombine.high %v292, %v292
        %vm294 = vcmask 31744
        %v296 = vsel %vm294, %v283, 0
        %v299 = vsel %vm294, %v284, 0
        %vm301 = vcmask 1041408
        %v303 = vsel %vm301, %v292, 0
        %v306 = vsel %vm301, %v293, 0
        %308 = vmatprep.subr.bf16.mxu0 0
        %309 = vmatpush1.bf16.msra.mxu0 0
        %310 = vmatprep.subr.bf16.mxu0 0
        %311 = vmatpush1.bf16.msra.mxu0 0
        %312 = vmatprep.subr.bf16.mxu0 0
        %313 = vmatpush1.bf16.msra.mxu0 0
        %314 = vmatprep.subr.bf16.mxu0 0
        %315 = vmatpush1.bf16.msra.mxu0 0
        %316 = vmatprep.subr.bf16.mxu0 0
        %317 = vmatpush1.bf16.msra.mxu0 0
        %318 = vmatprep.subr.bf16.mxu0 0
        %319 = vmatpush1.bf16.msra.mxu0 0
        %320 = vmatprep.subr.bf16.mxu0 0
        %321 = vmatpush1.bf16.msra.mxu0 0
        %322 = vmatprep.subr.bf16.mxu0 %v306
        %323 = vmatpush1.bf16.msra.mxu0 %v303
        %324 = vmatprep.subr.bf16.mxu0 0
        %325 = vmatpush2.bf16.msra.mxu0 0
        %326 = vmatprep.subr.bf16.mxu0 0
        %327 = vmatpush2.bf16.msra.mxu0 0
        %328 = vmatprep.subr.bf16.mxu0 0
        %329 = vmatpush2.bf16.msra.mxu0 0
        %330 = vmatprep.subr.bf16.mxu0 0
        %331 = vmatpush2.bf16.msra.mxu0 0
        %332 = vmatprep.subr.bf16.mxu0 0
        %333 = vmatpush2.bf16.msra.mxu0 0
        %334 = vmatprep.subr.bf16.mxu0 0
        %335 = vmatpush2.bf16.msra.mxu0 0
        %336 = vmatprep.subr.bf16.mxu0 0
        %337 = vmatpush2.bf16.msra.mxu0 0
        %338 = vmatprep.subr.bf16.mxu0 0
        %339 = vmatpush2.bf16.msra.mxu0 0
        %340 = vmatprep.mubr.bf16.mxu0 0
        %341 = vmatmul.mubr.bf16.gmra.mxu0 %v296
        %v342 = vpop.f32.mrf.mxu0
        %v343 = vadd.f32 %v265, %v342
        %v344 = vpop.f32.mrf.mxu0
        %v345 = vadd.f32 %v265, %v344
        %v346 = vpop.f32.mrf.mxu0
        %v347 = vadd.f32 %v270, %v346
        %v348 = vpop.f32.mrf.mxu0
        %v349 = vadd.f32 %v270, %v348
        %350 = vmatprep.mubr.bf16.mxu0 0
        %351 = vmatmul.mubr.bf16.gmra.mxu0 %v299
        %v352 = vpop.f32.mrf.mxu0
        %v353 = vadd.f32 %v275, %v352
        %v354 = vpop.f32.mrf.mxu0
        %v355 = vadd.f32 %v275, %v354
        %v356 = vpop.f32.mrf.mxu0
        %v357 = vpop.f32.mrf.mxu0
        %358 = vdwg.mxu0
        %359 = vst [vmem:[%s229] sm:$0xff] %v343
        %360 = vst [vmem:[%s229 + $0x8] sm:$0xff] %v345
        %361 = vst [vmem:[%s229 + $0x10] sm:$0xff] %v347
        %362 = vst [vmem:[%s229 + $0x18] sm:$0xff] %v349
        %363 = vst [vmem:[%s229 + $0x20] sm:$0xff] %v353
        %364 = vst [vmem:[%s229 + $0x28] sm:$0xff] %v355
        %s365 = sand.u32 %s128, 1
        %s366 = scalar_lea.sflag [#allocation3], %s365
        %s367 = sand.u32 %s128, 1
        %s368 = smul.addr %s367, 48
        %s369 = scalar_lea.vmem [#allocation2], %s368
        // Predicated region
        $region33: #{tpu_custom_call.1} parent=31 // pred_check
          %p370 = pneg %p138
        $region34: #{tpu_custom_call.1} parent=31 // pred_check_branch
          %372 = sbr.rel (%p370) target = $region36
        $region35: #{tpu_custom_call.1} parent=31 // pred_region
          %s373 = smul.u32 3, %s24
          %s374 = smul.u32 2, %s23
          %s376 = ssub.s32 768, 768
          %377 = vsyncadd %s366, %s376
          %s378 = smul.addr %s373, 2
          %s379 = sadd.s32 %s374, %s378
          %s380 = smul.addr %s22, 6
          %s381 = sadd.s32 %s379, %s380
          %s382 = smul.addr %s381, 128
          %s383 = scalar_lea.hbm %s3, %s382
          %s384 = sshll.u32 %s369, 4
          %s385 = int_to_ptr.vmem [resolvable:$true] %s384
          %390 = dma.vmem_to_hbm [thread:$0]  %s385, 768, %s383, %s366, 256, 256, 16
        $region36: #{tpu_custom_call.1} parent=31 // pred_fallthru
          _
      $region32: #{tpu_custom_call.1} parent=5 // pred_fallthru
        _
      %p391 = scmp.le.s32.totalorder 2, %s12
      // Predicated region
      $region37: #{tpu_custom_call.1} parent=5 // pred_check
        %p392 = pneg %p391
      $region38: #{tpu_custom_call.1} parent=5 // pred_check_branch
        %394 = sbr.rel (%p392) target = $region40
      $region39: #{tpu_custom_call.1} parent=5 // pred_region
        %s395 = ssub.s32 %s12, 2
        // Predicated region
        $region41: #{tpu_custom_call.1} parent=39 // pred_check
          %p396 = pneg %p144
        $region42: #{tpu_custom_call.1} parent=39 // pred_check_branch
          %398 = sbr.rel (%p396) target = $region44
        $region43: #{tpu_custom_call.1} parent=39 // pred_region
          %s399 = sand.u32 %s129, 1
          %s400 = scalar_lea.sflag [#allocation3], %s399
          %s401 = sand.u32 %s129, 1
          %s402 = smul.addr %s401, 48
          %s403 = scalar_lea.vmem [#allocation2], %s402
          %404 = dma.done %s400, 768
        $region44: #{tpu_custom_call.1} parent=39 // pred_fallthru
          _
      $region40: #{tpu_custom_call.1} parent=5 // pred_fallthru
        _
    $region6: #{tpu_custom_call.1} parent=1 // loop_footer
      %s16 = sadd.s32 1, %s12
    $region7: #{tpu_custom_call.1} parent=1 // loop_footer_branch
      %11 = sbr.rel target = $region3
    $region8: #{tpu_custom_call.1} parent=1 // loop_exit
      _
    %405 = vsyncpa [#allocation3], 1
    %s406 = scalar_lea.sflag [#allocation3], 1
    %407 = vsyncpa %s406, 1

</llo_original>
